<compile_context>
chip_gen: v7x
topology: tpu7x:2x2x1
jax: 0.10.0
libtpu: 0.0.40
codegen_flags: <defaults>
</compile_context>

<pallas_src>
import functools

import jax
import jax.numpy as jnp
from jax.experimental import pallas as pl
from jax.experimental.pallas import tpu as pltpu

TIME_SERIES_LENGTH = 64


def _softplus(v):
    # Branch-free softplus, numerically equivalent (in fp32) to
    # torch.nn.Softplus(beta=1, threshold=20).
    return jnp.maximum(v, 0.0) + jnp.log1p(jnp.exp(-jnp.abs(v)))


def cytokine_kernel(x_ref,
                    w1a_ref, b1a_ref,
                    w1b_ref, b1b_ref,
                    w1c_ref, b1c_ref,
                    w1d_ref, b1d_ref,
                    w2a_ref, b2a_ref,
                    w2b_ref, b2b_ref,
                    o_ref):
    h = x_ref[...]                                    # (in_dim, TB): batch on the lane axis

    def lin(h, w_ref, b_ref):
        # W: (out, in), h: (in, TB) -> (out, TB); bias (out, 1) broadcasts over lanes.
        return jnp.dot(w_ref[...], h, preferred_element_type=jnp.float32) + b_ref[...]

    h = _softplus(lin(h, w1a_ref, b1a_ref))           # fc1a + Softplus
    h = _softplus(lin(h, w1b_ref, b1b_ref))           # fc1b + Softplus
    h = _softplus(lin(h, w1c_ref, b1c_ref))           # fc1c + Softplus
    h = _softplus(lin(h, w1d_ref, b1d_ref))           # fc1d + Softplus
    h = _softplus(lin(h, w2a_ref, b2a_ref))           # fc2a + Softplus
    h = lin(h, w2b_ref, b2b_ref)                      # fc2b (no activation)
    o_ref[...] = h.astype(o_ref.dtype)                # lane-dense (out_dim, TB) store


def init_params(key, input_dim=6, h1=8, h2=5, pred='point'):
    """PyTorch-style Linear init: W (out, in), b (out, 1), uniform +/- 1/sqrt(fan_in)."""
    out_last = 5 if pred == 'point' else 5 * TIME_SERIES_LENGTH
    dims = [(input_dim, h1), (h1, h1), (h1, h1), (h1, 2), (2, h2), (h2, out_last)]
    params = []
    for fan_in, fan_out in dims:
        key, kw, kb = jax.random.split(key, 3)
        bound = 1.0 / (fan_in ** 0.5)
        w = jax.random.uniform(kw, (fan_out, fan_in), jnp.float32, -bound, bound)
        b = jax.random.uniform(kb, (fan_out, 1), jnp.float32, -bound, bound)
        params.extend([w, b])
    return params


@functools.partial(jax.jit, static_argnames=("batch_tile",))
def cytokine_forward(x, params, *, batch_tile=512):
    B, in_dim = x.shape
    out_dim = params[-2].shape[0]

    # Put batch on the lane axis and pad it up to a multiple of the batch tile.
    tb = batch_tile
    n_tiles = pl.cdiv(B, tb)
    b_pad = n_tiles * tb
    xt = jnp.transpose(x)                             # (in_dim, B)
    if b_pad != B:
        xt = jnp.pad(xt, ((0, 0), (0, b_pad - B)))

    x_spec = pl.BlockSpec((in_dim, tb), lambda i: (0, i))
    out_spec = pl.BlockSpec((out_dim, tb), lambda i: (0, i))
    # Weights / biases: tiny whole arrays with a constant index_map -> VMEM-resident.
    param_specs = [pl.BlockSpec(p.shape, lambda i: (0, 0)) for p in params]

    weights = params[0::2]
    flops = 2 * b_pad * sum(w.shape[0] * w.shape[1] for w in weights)
    transcendentals = 2 * b_pad * sum(w.shape[0] for w in weights[:-1])  # exp + log1p
    bytes_accessed = 4 * (b_pad * (in_dim + out_dim) + sum(p.size for p in params))

    out_t = pl.pallas_call(
        cytokine_kernel,
        out_shape=jax.ShapeDtypeStruct((out_dim, b_pad), jnp.float32),
        grid=(n_tiles,),
        in_specs=[x_spec] + param_specs,
        out_specs=out_spec,
        compiler_params=pltpu.CompilerParams(dimension_semantics=("parallel",)),
        cost_estimate=pl.CostEstimate(flops=flops,
                                      transcendentals=transcendentals,
                                      bytes_accessed=bytes_accessed),
    )(xt, *params)

    return jnp.transpose(out_t[:, :B])                # back to (B, out_dim)


def cytokine_ref(x, params):
    h = x
    n_layers = len(params) // 2
    for i in range(n_layers):
        w, b = params[2 * i], params[2 * i + 1]
        h = h @ w.T + b[:, 0]
        if i != n_layers - 1:
            h = _softplus(h)
    return h


if __name__ == "__main__":
    key = jax.random.PRNGKey(0)
    kx, kp = jax.random.split(key)

    B, INPUT = 300, 6
    x = jax.random.normal(kx, (B, INPUT), jnp.float32)
    params = init_params(kp, input_dim=INPUT, h1=8, h2=5, pred='point')

    # Small batch tile for the demo so the grid has several steps and the batch-padding
    # path is exercised; production default is 512 rows per tile.
    out = cytokine_forward(x, params, batch_tile=128)
    out = jax.block_until_ready(out)

    ref = cytokine_ref(x, params)
    assert out.shape == (B, 5), out.shape
    assert jnp.allclose(out, ref, atol=1e-5, rtol=1e-5), "mismatch vs JAX reference"

    print("KERNEL_OK")
</pallas_src>

<mosaic_0001>
module attributes {stable_mosaic.version = 11 : i64} {
  func.func @cytokine_kernel(%arg0: i32, %arg1: memref<6x128xf32, #tpu.memory_space<vmem>>, %arg2: memref<8x6xf32, #tpu.memory_space<vmem>>, %arg3: memref<8x1xf32, #tpu.memory_space<vmem>>, %arg4: memref<8x8xf32, #tpu.memory_space<vmem>>, %arg5: memref<8x1xf32, #tpu.memory_space<vmem>>, %arg6: memref<8x8xf32, #tpu.memory_space<vmem>>, %arg7: memref<8x1xf32, #tpu.memory_space<vmem>>, %arg8: memref<2x8xf32, #tpu.memory_space<vmem>>, %arg9: memref<2x1xf32, #tpu.memory_space<vmem>>, %arg10: memref<5x2xf32, #tpu.memory_space<vmem>>, %arg11: memref<5x1xf32, #tpu.memory_space<vmem>>, %arg12: memref<5x5xf32, #tpu.memory_space<vmem>>, %arg13: memref<5x1xf32, #tpu.memory_space<vmem>>, %arg14: memref<5x128xf32, #tpu.memory_space<vmem>>) attributes {dimension_semantics = [#tpu.dimension_semantics<parallel>], iteration_bounds = array<i64: 3>, scalar_prefetch = 0 : i64, scratch_operands = 0 : i64, tpu.core_type = #tpu.core_type<tc>, window_params = [{transform_indices = @transform_0, window_bounds = array<i64: 6, 128>}, {pipeline_mode = #tpu.pipeline_mode<synchronous>, transform_indices = @transform_1, window_bounds = array<i64: 8, 6>}, {pipeline_mode = #tpu.pipeline_mode<synchronous>, transform_indices = @transform_2, window_bounds = array<i64: 8, 1>}, {pipeline_mode = #tpu.pipeline_mode<synchronous>, transform_indices = @transform_3, window_bounds = array<i64: 8, 8>}, {pipeline_mode = #tpu.pipeline_mode<synchronous>, transform_indices = @transform_4, window_bounds = array<i64: 8, 1>}, {pipeline_mode = #tpu.pipeline_mode<synchronous>, transform_indices = @transform_5, window_bounds = array<i64: 8, 8>}, {pipeline_mode = #tpu.pipeline_mode<synchronous>, transform_indices = @transform_6, window_bounds = array<i64: 8, 1>}, {pipeline_mode = #tpu.pipeline_mode<synchronous>, transform_indices = @transform_7, window_bounds = array<i64: 2, 8>}, {pipeline_mode = #tpu.pipeline_mode<synchronous>, transform_indices = @transform_8, window_bounds = array<i64: 2, 1>}, {pipeline_mode = #tpu.pipeline_mode<synchronous>, transform_indices = @transform_9, window_bounds = array<i64: 5, 2>}, {pipeline_mode = #tpu.pipeline_mode<synchronous>, transform_indices = @transform_10, window_bounds = array<i64: 5, 1>}, {pipeline_mode = #tpu.pipeline_mode<synchronous>, transform_indices = @transform_11, window_bounds = array<i64: 5, 5>}, {pipeline_mode = #tpu.pipeline_mode<synchronous>, transform_indices = @transform_12, window_bounds = array<i64: 5, 1>}, {transform_indices = @transform_13, window_bounds = array<i64: 5, 128>}]} {
    %c0 = arith.constant 0 : index
    %c0_0 = arith.constant 0 : index
    %0 = vector.load %arg1[%c0, %c0_0] : memref<6x128xf32, #tpu.memory_space<vmem>>, vector<6x128xf32>
    %c0_1 = arith.constant 0 : index
    %c0_2 = arith.constant 0 : index
    %1 = vector.load %arg2[%c0_1, %c0_2] : memref<8x6xf32, #tpu.memory_space<vmem>>, vector<8x6xf32>
    %cst = arith.constant dense<0.000000e+00> : vector<8x128xf32>
    %2 = tpu.matmul %1, %0, %cst {dimension_numbers = #tpu.dot_dimension_numbers<[1], [0], [0], [1], [0, 0, 1, 1], [], []>} : vector<8x6xf32>, vector<6x128xf32>, vector<8x128xf32> -> vector<8x128xf32>
    %c0_3 = arith.constant 0 : index
    %c0_4 = arith.constant 0 : index
    %3 = vector.load %arg3[%c0_3, %c0_4] : memref<8x1xf32, #tpu.memory_space<vmem>>, vector<8x1xf32>
    %4 = vector.broadcast %3 : vector<8x1xf32> to vector<8x128xf32>
    %5 = arith.addf %2, %4 : vector<8x128xf32>
    %cst_5 = arith.constant 0.000000e+00 : f32
    %6 = vector.broadcast %cst_5 : f32 to vector<8x128xf32>
    %7 = arith.maximumf %5, %6 : vector<8x128xf32>
    %8 = math.absf %5 : vector<8x128xf32>
    %cst_6 = arith.constant 0.000000e+00 : f32
    %9 = vector.broadcast %cst_6 : f32 to vector<8x128xf32>
    %10 = arith.subf %9, %8 : vector<8x128xf32>
    %11 = math.exp %10 : vector<8x128xf32>
    %12 = math.log1p %11 : vector<8x128xf32>
    %13 = arith.addf %7, %12 : vector<8x128xf32>
    %c0_7 = arith.constant 0 : index
    %c0_8 = arith.constant 0 : index
    %14 = vector.load %arg4[%c0_7, %c0_8] : memref<8x8xf32, #tpu.memory_space<vmem>>, vector<8x8xf32>
    %cst_9 = arith.constant dense<0.000000e+00> : vector<8x128xf32>
    %15 = tpu.matmul %14, %13, %cst_9 {dimension_numbers = #tpu.dot_dimension_numbers<[1], [0], [0], [1], [0, 0, 1, 1], [], []>} : vector<8x8xf32>, vector<8x128xf32>, vector<8x128xf32> -> vector<8x128xf32>
    %c0_10 = arith.constant 0 : index
    %c0_11 = arith.constant 0 : index
    %16 = vector.load %arg5[%c0_10, %c0_11] : memref<8x1xf32, #tpu.memory_space<vmem>>, vector<8x1xf32>
    %17 = vector.broadcast %16 : vector<8x1xf32> to vector<8x128xf32>
    %18 = arith.addf %15, %17 : vector<8x128xf32>
    %cst_12 = arith.constant 0.000000e+00 : f32
    %19 = vector.broadcast %cst_12 : f32 to vector<8x128xf32>
    %20 = arith.maximumf %18, %19 : vector<8x128xf32>
    %21 = math.absf %18 : vector<8x128xf32>
    %cst_13 = arith.constant 0.000000e+00 : f32
    %22 = vector.broadcast %cst_13 : f32 to vector<8x128xf32>
    %23 = arith.subf %22, %21 : vector<8x128xf32>
    %24 = math.exp %23 : vector<8x128xf32>
    %25 = math.log1p %24 : vector<8x128xf32>
    %26 = arith.addf %20, %25 : vector<8x128xf32>
    %c0_14 = arith.constant 0 : index
    %c0_15 = arith.constant 0 : index
    %27 = vector.load %arg6[%c0_14, %c0_15] : memref<8x8xf32, #tpu.memory_space<vmem>>, vector<8x8xf32>
    %cst_16 = arith.constant dense<0.000000e+00> : vector<8x128xf32>
    %28 = tpu.matmul %27, %26, %cst_16 {dimension_numbers = #tpu.dot_dimension_numbers<[1], [0], [0], [1], [0, 0, 1, 1], [], []>} : vector<8x8xf32>, vector<8x128xf32>, vector<8x128xf32> -> vector<8x128xf32>
    %c0_17 = arith.constant 0 : index
    %c0_18 = arith.constant 0 : index
    %29 = vector.load %arg7[%c0_17, %c0_18] : memref<8x1xf32, #tpu.memory_space<vmem>>, vector<8x1xf32>
    %30 = vector.broadcast %29 : vector<8x1xf32> to vector<8x128xf32>
    %31 = arith.addf %28, %30 : vector<8x128xf32>
    %cst_19 = arith.constant 0.000000e+00 : f32
    %32 = vector.broadcast %cst_19 : f32 to vector<8x128xf32>
    %33 = arith.maximumf %31, %32 : vector<8x128xf32>
    %34 = math.absf %31 : vector<8x128xf32>
    %cst_20 = arith.constant 0.000000e+00 : f32
    %35 = vector.broadcast %cst_20 : f32 to vector<8x128xf32>
    %36 = arith.subf %35, %34 : vector<8x128xf32>
    %37 = math.exp %36 : vector<8x128xf32>
    %38 = math.log1p %37 : vector<8x128xf32>
    %39 = arith.addf %33, %38 : vector<8x128xf32>
    %c0_21 = arith.constant 0 : index
    %c0_22 = arith.constant 0 : index
    %40 = vector.load %arg8[%c0_21, %c0_22] : memref<2x8xf32, #tpu.memory_space<vmem>>, vector<2x8xf32>
    %cst_23 = arith.constant dense<0.000000e+00> : vector<2x128xf32>
    %41 = tpu.matmul %40, %39, %cst_23 {dimension_numbers = #tpu.dot_dimension_numbers<[1], [0], [0], [1], [0, 0, 1, 1], [], []>} : vector<2x8xf32>, vector<8x128xf32>, vector<2x128xf32> -> vector<2x128xf32>
    %c0_24 = arith.constant 0 : index
    %c0_25 = arith.constant 0 : index
    %42 = vector.load %arg9[%c0_24, %c0_25] : memref<2x1xf32, #tpu.memory_space<vmem>>, vector<2x1xf32>
    %43 = vector.broadcast %42 : vector<2x1xf32> to vector<2x128xf32>
    %44 = arith.addf %41, %43 : vector<2x128xf32>
    %cst_26 = arith.constant 0.000000e+00 : f32
    %45 = vector.broadcast %cst_26 : f32 to vector<2x128xf32>
    %46 = arith.maximumf %44, %45 : vector<2x128xf32>
    %47 = math.absf %44 : vector<2x128xf32>
    %cst_27 = arith.constant 0.000000e+00 : f32
    %48 = vector.broadcast %cst_27 : f32 to vector<2x128xf32>
    %49 = arith.subf %48, %47 : vector<2x128xf32>
    %50 = math.exp %49 : vector<2x128xf32>
    %51 = math.log1p %50 : vector<2x128xf32>
    %52 = arith.addf %46, %51 : vector<2x128xf32>
    %c0_28 = arith.constant 0 : index
    %c0_29 = arith.constant 0 : index
    %53 = vector.load %arg10[%c0_28, %c0_29] : memref<5x2xf32, #tpu.memory_space<vmem>>, vector<5x2xf32>
    %cst_30 = arith.constant dense<0.000000e+00> : vector<5x128xf32>
    %54 = tpu.matmul %53, %52, %cst_30 {dimension_numbers = #tpu.dot_dimension_numbers<[1], [0], [0], [1], [0, 0, 1, 1], [], []>} : vector<5x2xf32>, vector<2x128xf32>, vector<5x128xf32> -> vector<5x128xf32>
    %c0_31 = arith.constant 0 : index
    %c0_32 = arith.constant 0 : index
    %55 = vector.load %arg11[%c0_31, %c0_32] : memref<5x1xf32, #tpu.memory_space<vmem>>, vector<5x1xf32>
    %56 = vector.broadcast %55 : vector<5x1xf32> to vector<5x128xf32>
    %57 = arith.addf %54, %56 : vector<5x128xf32>
    %cst_33 = arith.constant 0.000000e+00 : f32
    %58 = vector.broadcast %cst_33 : f32 to vector<5x128xf32>
    %59 = arith.maximumf %57, %58 : vector<5x128xf32>
    %60 = math.absf %57 : vector<5x128xf32>
    %cst_34 = arith.constant 0.000000e+00 : f32
    %61 = vector.broadcast %cst_34 : f32 to vector<5x128xf32>
    %62 = arith.subf %61, %60 : vector<5x128xf32>
    %63 = math.exp %62 : vector<5x128xf32>
    %64 = math.log1p %63 : vector<5x128xf32>
    %65 = arith.addf %59, %64 : vector<5x128xf32>
    %c0_35 = arith.constant 0 : index
    %c0_36 = arith.constant 0 : index
    %66 = vector.load %arg12[%c0_35, %c0_36] : memref<5x5xf32, #tpu.memory_space<vmem>>, vector<5x5xf32>
    %cst_37 = arith.constant dense<0.000000e+00> : vector<5x128xf32>
    %67 = tpu.matmul %66, %65, %cst_37 {dimension_numbers = #tpu.dot_dimension_numbers<[1], [0], [0], [1], [0, 0, 1, 1], [], []>} : vector<5x5xf32>, vector<5x128xf32>, vector<5x128xf32> -> vector<5x128xf32>
    %c0_38 = arith.constant 0 : index
    %c0_39 = arith.constant 0 : index
    %68 = vector.load %arg13[%c0_38, %c0_39] : memref<5x1xf32, #tpu.memory_space<vmem>>, vector<5x1xf32>
    %69 = vector.broadcast %68 : vector<5x1xf32> to vector<5x128xf32>
    %70 = arith.addf %67, %69 : vector<5x128xf32>
    %c0_40 = arith.constant 0 : index
    %c0_41 = arith.constant 0 : index
    %71 = vector.load %arg14[%c0_40, %c0_41] : memref<5x128xf32, #tpu.memory_space<vmem>>, vector<5x128xf32>
    tpu.vector_store %arg14[%c0_40, %c0_41], %70 {strides = array<i32>} : memref<5x128xf32, #tpu.memory_space<vmem>>, vector<5x128xf32>,
    return
  }
  func.func @transform_0(%arg0: i32) -> (i32, i32) {
    %c0_i32 = arith.constant 0 : i32
    %c0_i32_0 = arith.constant 0 : i32
    return %c0_i32, %arg0 : i32, i32
  }
  func.func @transform_1(%arg0: i32) -> (i32, i32) {
    %c0_i32 = arith.constant 0 : i32
    %c0_i32_0 = arith.constant 0 : i32
    %c0_i32_1 = arith.constant 0 : i32
    return %c0_i32, %c0_i32_0 : i32, i32
  }
  func.func @transform_2(%arg0: i32) -> (i32, i32) {
    %c0_i32 = arith.constant 0 : i32
    %c0_i32_0 = arith.constant 0 : i32
    %c0_i32_1 = arith.constant 0 : i32
    return %c0_i32, %c0_i32_0 : i32, i32
  }
  func.func @transform_3(%arg0: i32) -> (i32, i32) {
    %c0_i32 = arith.constant 0 : i32
    %c0_i32_0 = arith.constant 0 : i32
    %c0_i32_1 = arith.constant 0 : i32
    return %c0_i32, %c0_i32_0 : i32, i32
  }
  func.func @transform_4(%arg0: i32) -> (i32, i32) {
    %c0_i32 = arith.constant 0 : i32
    %c0_i32_0 = arith.constant 0 : i32
    %c0_i32_1 = arith.constant 0 : i32
    return %c0_i32, %c0_i32_0 : i32, i32
  }
  func.func @transform_5(%arg0: i32) -> (i32, i32) {
    %c0_i32 = arith.constant 0 : i32
    %c0_i32_0 = arith.constant 0 : i32
    %c0_i32_1 = arith.constant 0 : i32
    return %c0_i32, %c0_i32_0 : i32, i32
  }
  func.func @transform_6(%arg0: i32) -> (i32, i32) {
    %c0_i32 = arith.constant 0 : i32
    %c0_i32_0 = arith.constant 0 : i32
    %c0_i32_1 = arith.constant 0 : i32
    return %c0_i32, %c0_i32_0 : i32, i32
  }
  func.func @transform_7(%arg0: i32) -> (i32, i32) {
    %c0_i32 = arith.constant 0 : i32
    %c0_i32_0 = arith.constant 0 : i32
    %c0_i32_1 = arith.constant 0 : i32
    return %c0_i32, %c0_i32_0 : i32, i32
  }
  func.func @transform_8(%arg0: i32) -> (i32, i32) {
    %c0_i32 = arith.constant 0 : i32
    %c0_i32_0 = arith.constant 0 : i32
    %c0_i32_1 = arith.constant 0 : i32
    return %c0_i32, %c0_i32_0 : i32, i32
  }
  func.func @transform_9(%arg0: i32) -> (i32, i32) {
    %c0_i32 = arith.constant 0 : i32
    %c0_i32_0 = arith.constant 0 : i32
    %c0_i32_1 = arith.constant 0 : i32
    return %c0_i32, %c0_i32_0 : i32, i32
  }
  func.func @transform_10(%arg0: i32) -> (i32, i32) {
    %c0_i32 = arith.constant 0 : i32
    %c0_i32_0 = arith.constant 0 : i32
    %c0_i32_1 = arith.constant 0 : i32
    return %c0_i32, %c0_i32_0 : i32, i32
  }
  func.func @transform_11(%arg0: i32) -> (i32, i32) {
    %c0_i32 = arith.constant 0 : i32
    %c0_i32_0 = arith.constant 0 : i32
    %c0_i32_1 = arith.constant 0 : i32
    return %c0_i32, %c0_i32_0 : i32, i32
  }
  func.func @transform_12(%arg0: i32) -> (i32, i32) {
    %c0_i32 = arith.constant 0 : i32
    %c0_i32_0 = arith.constant 0 : i32
    %c0_i32_1 = arith.constant 0 : i32
    return %c0_i32, %c0_i32_0 : i32, i32
  }
  func.func @transform_13(%arg0: i32) -> (i32, i32) {
    %c0_i32 = arith.constant 0 : i32
    %c0_i32_0 = arith.constant 0 : i32
    return %c0_i32, %arg0 : i32, i32
  }
}

</mosaic_0001>

<llo_original>
// kernel: cytokine_forward.1
$region0: #{cytokine_forward.1}
  #allocation0 [shape = 'u32[]', space=smem, size = 0x4, offset = 0x4, fixed_abs, tag = 'smem constant byte address 0x4 - core index']
  #allocation1 [shape = 'u32[144,128]{1,0:T(1,128)}', space=vmem, size = 0x12000, scoped, tag = 'internal scratch']
  %s0 = inlined_call_operand.vmem [shape: f32[6,384], index: 0, kind: input, shape index: {}]
  %s1 = inlined_call_operand.vmem [shape: f32[8,6], index: 1, kind: input, shape index: {}]
  %s2 = inlined_call_operand.vmem [shape: f32[8,1], index: 2, kind: input, shape index: {}]
  %s3 = inlined_call_operand.vmem [shape: f32[8,8], index: 3, kind: input, shape index: {}]
  %s4 = inlined_call_operand.vmem [shape: f32[8,1], index: 4, kind: input, shape index: {}]
  %s5 = inlined_call_operand.vmem [shape: f32[8,8], index: 5, kind: input, shape index: {}]
  %s6 = inlined_call_operand.vmem [shape: f32[8,1], index: 6, kind: input, shape index: {}]
  %s7 = inlined_call_operand.vmem [shape: f32[2,8], index: 7, kind: input, shape index: {}]
  %s8 = inlined_call_operand.vmem [shape: f32[2,1], index: 8, kind: input, shape index: {}]
  %s9 = inlined_call_operand.vmem [shape: f32[5,2], index: 9, kind: input, shape index: {}]
  %s10 = inlined_call_operand.vmem [shape: f32[5,1], index: 10, kind: input, shape index: {}]
  %s11 = inlined_call_operand.vmem [shape: f32[5,5], index: 11, kind: input, shape index: {}]
  %s12 = inlined_call_operand.vmem [shape: f32[5,1], index: 12, kind: input, shape index: {}]
  %s13 = inlined_call_operand.vmem [shape: f32[5,384], index: 13, kind: output, shape index: {}]
  %s14 = sld [smem:[#allocation0]]
  $region85: #{cytokine_forward.1} parent=0
    _
  %s16 = ssub.s32 1, %s14
  %s17 = scalar_select 0, %s16, %s14
  loop: start=0, step=1, limit=5
  $region2: #{cytokine_forward.1} parent=0 // loop_pre_header
    _
  $region3: #{cytokine_forward.1} parent=0 // loop_header
    %s19 = sphi 0, %s23
    %p20 = scmp.ge.s32.totalorder %s19, 5
    %s29 = sphi 0, %s31
    %s32 = sphi 0, %s29
    %s33 = sphi 0, %s32
    %s49 = sphi 0, %s33
    %s53 = sphi 0, %s53
    %s55 = sphi 0, %s53
    %s56 = sphi 0, %s55
    %s70 = sphi 0, %s56
    %s74 = sphi 0, %s74
    %s76 = sphi 0, %s74
    %s77 = sphi 0, %s76
    %s91 = sphi 0, %s77
    %s95 = sphi 0, %s95
    %s97 = sphi 0, %s95
    %s98 = sphi 0, %s97
    %s112 = sphi 0, %s98
    %s116 = sphi 0, %s116
    %s118 = sphi 0, %s116
    %s119 = sphi 0, %s118
    %s133 = sphi 0, %s119
    %s137 = sphi 0, %s137
    %s139 = sphi 0, %s137
    %s140 = sphi 0, %s139
    %s154 = sphi 0, %s140
    %s158 = sphi 0, %s158
    %s160 = sphi 0, %s158
    %s161 = sphi 0, %s160
    %s175 = sphi 0, %s161
    %s179 = sphi 0, %s179
    %s181 = sphi 0, %s179
    %s182 = sphi 0, %s181
    %s196 = sphi 0, %s182
    %s200 = sphi 0, %s200
    %s202 = sphi 0, %s200
    %s203 = sphi 0, %s202
    %s217 = sphi 0, %s203
    %s221 = sphi 0, %s221
    %s223 = sphi 0, %s221
    %s224 = sphi 0, %s223
    %s238 = sphi 0, %s224
    %s242 = sphi 0, %s242
    %s244 = sphi 0, %s242
    %s245 = sphi 0, %s244
    %s259 = sphi 0, %s245
    %s263 = sphi 0, %s263
    %s265 = sphi 0, %s263
    %s266 = sphi 0, %s265
    %s280 = sphi 0, %s266
    %s284 = sphi 0, %s284
    %s286 = sphi 0, %s284
    %s287 = sphi 0, %s286
    %s301 = sphi 0, %s287
    %s307 = sphi 0, %s309
    %s310 = sphi 0, %s307
    %s311 = sphi 0, %s310
    %s327 = sphi 0, %s311
  $region4: #{cytokine_forward.1} parent=0 // loop_header_branch
    %22 = sbr.rel (%p20) target = $region8
  $region5: #{cytokine_forward.1} parent=0 // loop_body
    %s24 = ssub.s32 %s19, 1
    %s25 = ssub.s32 %s19, 2
    %s26 = sadd.s32 %s19, 1
    %s27 = ssub.s32 %s19, %s26
    %p28 = scmp.eq.s32.totalorder %s27, 0
    %s30 = sadd.s32 %s29, 1
    %s31 = scalar_select %p28, %s29, %s30
    %p34 = pneg %p28
    %p35 = scmp.eq.s32.totalorder %s19, 2
    %p36 = por %p34, %p35
    %p37 = scmp.ne.s32.totalorder %s29, %s32
    %p38 = scmp.eq.s32.totalorder %s19, 0
    %p39 = por %p37, %p38
    %p40 = scmp.ne.s32.totalorder %s29, %s32
    %p41 = scmp.eq.s32.totalorder %s24, 2
    %p42 = por %p40, %p41
    %p43 = scmp.ne.s32.totalorder %s32, %s33
    %p44 = scmp.eq.s32.totalorder %s24, 0
    %p45 = por %p43, %p44
    %p46 = scmp.ne.s32.totalorder %s32, %s33
    %p47 = scmp.eq.s32.totalorder %s25, 2
    %p48 = por %p46, %p47
    %p50 = scmp.ne.s32.totalorder %s33, %s49
    %p51 = scmp.eq.s32.totalorder %s25, 0
    %p52 = por %p50, %p51
    %s54 = sadd.s32 %s53, 1
    %p57 = scmp.eq.s32.totalorder %s19, 2
    %p58 = scmp.ne.s32.totalorder %s53, %s55
    %p59 = scmp.eq.s32.totalorder %s19, 0
    %p60 = por %p58, %p59
    %p61 = scmp.ne.s32.totalorder %s53, %s55
    %p62 = scmp.eq.s32.totalorder %s24, 2
    %p63 = por %p61, %p62
    %p64 = scmp.ne.s32.totalorder %s55, %s56
    %p65 = scmp.eq.s32.totalorder %s24, 0
    %p66 = por %p64, %p65
    %p67 = scmp.ne.s32.totalorder %s55, %s56
    %p68 = scmp.eq.s32.totalorder %s25, 2
    %p69 = por %p67, %p68
    %p71 = scmp.ne.s32.totalorder %s56, %s70
    %p72 = scmp.eq.s32.totalorder %s25, 0
    %p73 = por %p71, %p72
    %s75 = sadd.s32 %s74, 1
    %p78 = scmp.eq.s32.totalorder %s19, 2
    %p79 = scmp.ne.s32.totalorder %s74, %s76
    %p80 = scmp.eq.s32.totalorder %s19, 0
    %p81 = por %p79, %p80
    %p82 = scmp.ne.s32.totalorder %s74, %s76
    %p83 = scmp.eq.s32.totalorder %s24, 2
    %p84 = por %p82, %p83
    %p85 = scmp.ne.s32.totalorder %s76, %s77
    %p86 = scmp.eq.s32.totalorder %s24, 0
    %p87 = por %p85, %p86
    %p88 = scmp.ne.s32.totalorder %s76, %s77
    %p89 = scmp.eq.s32.totalorder %s25, 2
    %p90 = por %p88, %p89
    %p92 = scmp.ne.s32.totalorder %s77, %s91
    %p93 = scmp.eq.s32.totalorder %s25, 0
    %p94 = por %p92, %p93
    %s96 = sadd.s32 %s95, 1
    %p99 = scmp.eq.s32.totalorder %s19, 2
    %p100 = scmp.ne.s32.totalorder %s95, %s97
    %p101 = scmp.eq.s32.totalorder %s19, 0
    %p102 = por %p100, %p101
    %p103 = scmp.ne.s32.totalorder %s95, %s97
    %p104 = scmp.eq.s32.totalorder %s24, 2
    %p105 = por %p103, %p104
    %p106 = scmp.ne.s32.totalorder %s97, %s98
    %p107 = scmp.eq.s32.totalorder %s24, 0
    %p108 = por %p106, %p107
    %p109 = scmp.ne.s32.totalorder %s97, %s98
    %p110 = scmp.eq.s32.totalorder %s25, 2
    %p111 = por %p109, %p110
    %p113 = scmp.ne.s32.totalorder %s98, %s112
    %p114 = scmp.eq.s32.totalorder %s25, 0
    %p115 = por %p113, %p114
    %s117 = sadd.s32 %s116, 1
    %p120 = scmp.eq.s32.totalorder %s19, 2
    %p121 = scmp.ne.s32.totalorder %s116, %s118
    %p122 = scmp.eq.s32.totalorder %s19, 0
    %p123 = por %p121, %p122
    %p124 = scmp.ne.s32.totalorder %s116, %s118
    %p125 = scmp.eq.s32.totalorder %s24, 2
    %p126 = por %p124, %p125
    %p127 = scmp.ne.s32.totalorder %s118, %s119
    %p128 = scmp.eq.s32.totalorder %s24, 0
    %p129 = por %p127, %p128
    %p130 = scmp.ne.s32.totalorder %s118, %s119
    %p131 = scmp.eq.s32.totalorder %s25, 2
    %p132 = por %p130, %p131
    %p134 = scmp.ne.s32.totalorder %s119, %s133
    %p135 = scmp.eq.s32.totalorder %s25, 0
    %p136 = por %p134, %p135
    %s138 = sadd.s32 %s137, 1
    %p141 = scmp.eq.s32.totalorder %s19, 2
    %p142 = scmp.ne.s32.totalorder %s137, %s139
    %p143 = scmp.eq.s32.totalorder %s19, 0
    %p144 = por %p142, %p143
    %p145 = scmp.ne.s32.totalorder %s137, %s139
    %p146 = scmp.eq.s32.totalorder %s24, 2
    %p147 = por %p145, %p146
    %p148 = scmp.ne.s32.totalorder %s139, %s140
    %p149 = scmp.eq.s32.totalorder %s24, 0
    %p150 = por %p148, %p149
    %p151 = scmp.ne.s32.totalorder %s139, %s140
    %p152 = scmp.eq.s32.totalorder %s25, 2
    %p153 = por %p151, %p152
    %p155 = scmp.ne.s32.totalorder %s140, %s154
    %p156 = scmp.eq.s32.totalorder %s25, 0
    %p157 = por %p155, %p156
    %s159 = sadd.s32 %s158, 1
    %p162 = scmp.eq.s32.totalorder %s19, 2
    %p163 = scmp.ne.s32.totalorder %s158, %s160
    %p164 = scmp.eq.s32.totalorder %s19, 0
    %p165 = por %p163, %p164
    %p166 = scmp.ne.s32.totalorder %s158, %s160
    %p167 = scmp.eq.s32.totalorder %s24, 2
    %p168 = por %p166, %p167
    %p169 = scmp.ne.s32.totalorder %s160, %s161
    %p170 = scmp.eq.s32.totalorder %s24, 0
    %p171 = por %p169, %p170
    %p172 = scmp.ne.s32.totalorder %s160, %s161
    %p173 = scmp.eq.s32.totalorder %s25, 2
    %p174 = por %p172, %p173
    %p176 = scmp.ne.s32.totalorder %s161, %s175
    %p177 = scmp.eq.s32.totalorder %s25, 0
    %p178 = por %p176, %p177
    %s180 = sadd.s32 %s179, 1
    %p183 = scmp.eq.s32.totalorder %s19, 2
    %p184 = scmp.ne.s32.totalorder %s179, %s181
    %p185 = scmp.eq.s32.totalorder %s19, 0
    %p186 = por %p184, %p185
    %p187 = scmp.ne.s32.totalorder %s179, %s181
    %p188 = scmp.eq.s32.totalorder %s24, 2
    %p189 = por %p187, %p188
    %p190 = scmp.ne.s32.totalorder %s181, %s182
    %p191 = scmp.eq.s32.totalorder %s24, 0
    %p192 = por %p190, %p191
    %p193 = scmp.ne.s32.totalorder %s181, %s182
    %p194 = scmp.eq.s32.totalorder %s25, 2
    %p195 = por %p193, %p194
    %p197 = scmp.ne.s32.totalorder %s182, %s196
    %p198 = scmp.eq.s32.totalorder %s25, 0
    %p199 = por %p197, %p198
    %s201 = sadd.s32 %s200, 1
    %p204 = scmp.eq.s32.totalorder %s19, 2
    %p205 = scmp.ne.s32.totalorder %s200, %s202
    %p206 = scmp.eq.s32.totalorder %s19, 0
    %p207 = por %p205, %p206
    %p208 = scmp.ne.s32.totalorder %s200, %s202
    %p209 = scmp.eq.s32.totalorder %s24, 2
    %p210 = por %p208, %p209
    %p211 = scmp.ne.s32.totalorder %s202, %s203
    %p212 = scmp.eq.s32.totalorder %s24, 0
    %p213 = por %p211, %p212
    %p214 = scmp.ne.s32.totalorder %s202, %s203
    %p215 = scmp.eq.s32.totalorder %s25, 2
    %p216 = por %p214, %p215
    %p218 = scmp.ne.s32.totalorder %s203, %s217
    %p219 = scmp.eq.s32.totalorder %s25, 0
    %p220 = por %p218, %p219
    %s222 = sadd.s32 %s221, 1
    %p225 = scmp.eq.s32.totalorder %s19, 2
    %p226 = scmp.ne.s32.totalorder %s221, %s223
    %p227 = scmp.eq.s32.totalorder %s19, 0
    %p228 = por %p226, %p227
    %p229 = scmp.ne.s32.totalorder %s221, %s223
    %p230 = scmp.eq.s32.totalorder %s24, 2
    %p231 = por %p229, %p230
    %p232 = scmp.ne.s32.totalorder %s223, %s224
    %p233 = scmp.eq.s32.totalorder %s24, 0
    %p234 = por %p232, %p233
    %p235 = scmp.ne.s32.totalorder %s223, %s224
    %p236 = scmp.eq.s32.totalorder %s25, 2
    %p237 = por %p235, %p236
    %p239 = scmp.ne.s32.totalorder %s224, %s238
    %p240 = scmp.eq.s32.totalorder %s25, 0
    %p241 = por %p239, %p240
    %s243 = sadd.s32 %s242, 1
    %p246 = scmp.eq.s32.totalorder %s19, 2
    %p247 = scmp.ne.s32.totalorder %s242, %s244
    %p248 = scmp.eq.s32.totalorder %s19, 0
    %p249 = por %p247, %p248
    %p250 = scmp.ne.s32.totalorder %s242, %s244
    %p251 = scmp.eq.s32.totalorder %s24, 2
    %p252 = por %p250, %p251
    %p253 = scmp.ne.s32.totalorder %s244, %s245
    %p254 = scmp.eq.s32.totalorder %s24, 0
    %p255 = por %p253, %p254
    %p256 = scmp.ne.s32.totalorder %s244, %s245
    %p257 = scmp.eq.s32.totalorder %s25, 2
    %p258 = por %p256, %p257
    %p260 = scmp.ne.s32.totalorder %s245, %s259
    %p261 = scmp.eq.s32.totalorder %s25, 0
    %p262 = por %p260, %p261
    %s264 = sadd.s32 %s263, 1
    %p267 = scmp.eq.s32.totalorder %s19, 2
    %p268 = scmp.ne.s32.totalorder %s263, %s265
    %p269 = scmp.eq.s32.totalorder %s19, 0
    %p270 = por %p268, %p269
    %p271 = scmp.ne.s32.totalorder %s263, %s265
    %p272 = scmp.eq.s32.totalorder %s24, 2
    %p273 = por %p271, %p272
    %p274 = scmp.ne.s32.totalorder %s265, %s266
    %p275 = scmp.eq.s32.totalorder %s24, 0
    %p276 = por %p274, %p275
    %p277 = scmp.ne.s32.totalorder %s265, %s266
    %p278 = scmp.eq.s32.totalorder %s25, 2
    %p279 = por %p277, %p278
    %p281 = scmp.ne.s32.totalorder %s266, %s280
    %p282 = scmp.eq.s32.totalorder %s25, 0
    %p283 = por %p281, %p282
    %s285 = sadd.s32 %s284, 1
    %p288 = scmp.eq.s32.totalorder %s19, 2
    %p289 = scmp.ne.s32.totalorder %s284, %s286
    %p290 = scmp.eq.s32.totalorder %s19, 0
    %p291 = por %p289, %p290
    %p292 = scmp.ne.s32.totalorder %s284, %s286
    %p293 = scmp.eq.s32.totalorder %s24, 2
    %p294 = por %p292, %p293
    %p295 = scmp.ne.s32.totalorder %s286, %s287
    %p296 = scmp.eq.s32.totalorder %s24, 0
    %p297 = por %p295, %p296
    %p298 = scmp.ne.s32.totalorder %s286, %s287
    %p299 = scmp.eq.s32.totalorder %s25, 2
    %p300 = por %p298, %p299
    %p302 = scmp.ne.s32.totalorder %s287, %s301
    %p303 = scmp.eq.s32.totalorder %s25, 0
    %p304 = por %p302, %p303
    %s305 = ssub.s32 %s19, %s26
    %p306 = scmp.eq.s32.totalorder %s305, 0
    %s308 = sadd.s32 %s307, 1
    %s309 = scalar_select %p306, %s307, %s308
    %p312 = pneg %p306
    %p313 = scmp.eq.s32.totalorder %s19, 2
    %p314 = por %p312, %p313
    %p315 = scmp.ne.s32.totalorder %s307, %s310
    %p316 = scmp.eq.s32.totalorder %s19, 0
    %p317 = por %p315, %p316
    %p318 = scmp.ne.s32.totalorder %s307, %s310
    %p319 = scmp.eq.s32.totalorder %s24, 2
    %p320 = por %p318, %p319
    %p321 = scmp.ne.s32.totalorder %s310, %s311
    %p322 = scmp.eq.s32.totalorder %s24, 0
    %p323 = por %p321, %p322
    %p324 = scmp.ne.s32.totalorder %s310, %s311
    %p325 = scmp.eq.s32.totalorder %s25, 2
    %p326 = por %p324, %p325
    %p328 = scmp.ne.s32.totalorder %s311, %s327
    %p329 = scmp.eq.s32.totalorder %s25, 0
    %p330 = por %p328, %p329
    %p331 = scmp.le.s32.totalorder 1, %s19
    %p332 = scmp.lt.s32.totalorder %s19, 4
    %p333 = pnand %p331, %p332
    %p334 = pneg %p333
    // Predicated region
    $region9: #{cytokine_forward.1} parent=5 // pred_check
      _
    $region10: #{cytokine_forward.1} parent=5 // pred_check_branch
      %336 = sbr.rel (%p333) target = $region12
    $region11: #{cytokine_forward.1} parent=5 // pred_region
      %s337 = ssub.s32 %s19, 1
      // Predicated region
      $region13: #{cytokine_forward.1} parent=11 // pred_check
        %p338 = pneg %p66
      $region14: #{cytokine_forward.1} parent=11 // pred_check_branch
        %340 = sbr.rel (%p338) target = $region16
      $region15: #{cytokine_forward.1} parent=11 // pred_region
        _
      $region16: #{cytokine_forward.1} parent=11 // pred_fallthru
        _
      // Predicated region
      $region17: #{cytokine_forward.1} parent=11 // pred_check
        %p341 = pneg %p87
      $region18: #{cytokine_forward.1} parent=11 // pred_check_branch
        %343 = sbr.rel (%p341) target = $region20
      $region19: #{cytokine_forward.1} parent=11 // pred_region
        _
      $region20: #{cytokine_forward.1} parent=11 // pred_fallthru
        _
      // Predicated region
      $region21: #{cytokine_forward.1} parent=11 // pred_check
        %p344 = pneg %p108
      $region22: #{cytokine_forward.1} parent=11 // pred_check_branch
        %346 = sbr.rel (%p344) target = $region24
      $region23: #{cytokine_forward.1} parent=11 // pred_region
        _
      $region24: #{cytokine_forward.1} parent=11 // pred_fallthru
        _
      // Predicated region
      $region25: #{cytokine_forward.1} parent=11 // pred_check
        %p347 = pneg %p129
      $region26: #{cytokine_forward.1} parent=11 // pred_check_branch
        %349 = sbr.rel (%p347) target = $region28
      $region27: #{cytokine_forward.1} parent=11 // pred_region
        _
      $region28: #{cytokine_forward.1} parent=11 // pred_fallthru
        _
      // Predicated region
      $region29: #{cytokine_forward.1} parent=11 // pred_check
        %p350 = pneg %p150
      $region30: #{cytokine_forward.1} parent=11 // pred_check_branch
        %352 = sbr.rel (%p350) target = $region32
      $region31: #{cytokine_forward.1} parent=11 // pred_region
        _
      $region32: #{cytokine_forward.1} parent=11 // pred_fallthru
        _
      // Predicated region
      $region33: #{cytokine_forward.1} parent=11 // pred_check
        %p353 = pneg %p171
      $region34: #{cytokine_forward.1} parent=11 // pred_check_branch
        %355 = sbr.rel (%p353) target = $region36
      $region35: #{cytokine_forward.1} parent=11 // pred_region
        _
      $region36: #{cytokine_forward.1} parent=11 // pred_fallthru
        _
      // Predicated region
      $region37: #{cytokine_forward.1} parent=11 // pred_check
        %p356 = pneg %p192
      $region38: #{cytokine_forward.1} parent=11 // pred_check_branch
        %358 = sbr.rel (%p356) target = $region40
      $region39: #{cytokine_forward.1} parent=11 // pred_region
        _
      $region40: #{cytokine_forward.1} parent=11 // pred_fallthru
        _
      // Predicated region
      $region41: #{cytokine_forward.1} parent=11 // pred_check
        %p359 = pneg %p213
      $region42: #{cytokine_forward.1} parent=11 // pred_check_branch
        %361 = sbr.rel (%p359) target = $region44
      $region43: #{cytokine_forward.1} parent=11 // pred_region
        _
      $region44: #{cytokine_forward.1} parent=11 // pred_fallthru
        _
      // Predicated region
      $region45: #{cytokine_forward.1} parent=11 // pred_check
        %p362 = pneg %p234
      $region46: #{cytokine_forward.1} parent=11 // pred_check_branch
        %364 = sbr.rel (%p362) target = $region48
      $region47: #{cytokine_forward.1} parent=11 // pred_region
        _
      $region48: #{cytokine_forward.1} parent=11 // pred_fallthru
        _
      // Predicated region
      $region49: #{cytokine_forward.1} parent=11 // pred_check
        %p365 = pneg %p255
      $region50: #{cytokine_forward.1} parent=11 // pred_check_branch
        %367 = sbr.rel (%p365) target = $region52
      $region51: #{cytokine_forward.1} parent=11 // pred_region
        _
      $region52: #{cytokine_forward.1} parent=11 // pred_fallthru
        _
      // Predicated region
      $region53: #{cytokine_forward.1} parent=11 // pred_check
        %p368 = pneg %p276
      $region54: #{cytokine_forward.1} parent=11 // pred_check_branch
        %370 = sbr.rel (%p368) target = $region56
      $region55: #{cytokine_forward.1} parent=11 // pred_region
        _
      $region56: #{cytokine_forward.1} parent=11 // pred_fallthru
        _
      // Predicated region
      $region57: #{cytokine_forward.1} parent=11 // pred_check
        %p371 = pneg %p297
      $region58: #{cytokine_forward.1} parent=11 // pred_check_branch
        %373 = sbr.rel (%p371) target = $region60
      $region59: #{cytokine_forward.1} parent=11 // pred_region
        _
      $region60: #{cytokine_forward.1} parent=11 // pred_fallthru
        _
    $region12: #{cytokine_forward.1} parent=5 // pred_fallthru
      _
    %p374 = scmp.lt.s32.totalorder %s19, 3
    // Predicated region
    $region61: #{cytokine_forward.1} parent=5 // pred_check
      %p375 = pneg %p374
    $region62: #{cytokine_forward.1} parent=5 // pred_check_branch
      %377 = sbr.rel (%p375) target = $region64
    $region63: #{cytokine_forward.1} parent=5 // pred_region
      // Predicated region
      $region65: #{cytokine_forward.1} parent=63 // pred_check
        %p378 = pneg %p39
      $region66: #{cytokine_forward.1} parent=63 // pred_check_branch
        %380 = sbr.rel (%p378) target = $region68
      $region67: #{cytokine_forward.1} parent=63 // pred_region
        %p381 = scmp.lt.s32.totalorder %s19, 2
        %s382 = scalar_select %p381, %s19, 2
        %s383 = smul.addr %s382, 8
        %s384 = scalar_lea.vmem %s0, %s383
      $region68: #{cytokine_forward.1} parent=63 // pred_fallthru
        _
    $region64: #{cytokine_forward.1} parent=5 // pred_fallthru
      _
    %p385 = scmp.le.s32.totalorder 1, %s19
    %p386 = scmp.lt.s32.totalorder %s19, 4
    %p387 = pnand %p385, %p386
    %p388 = pneg %p387
    // Predicated region
    $region69: #{cytokine_forward.1} parent=5 // pred_check
      _
    $region70: #{cytokine_forward.1} parent=5 // pred_check_branch
      %390 = sbr.rel (%p387) target = $region72
    $region71: #{cytokine_forward.1} parent=5 // pred_region
      %s391 = ssub.s32 %s19, 1
      %p392 = scmp.lt.s32.totalorder %s24, 2
      %s393 = scalar_select %p392, %s24, 2
      %s394 = smul.addr %s393, 8
      %s395 = scalar_lea.vmem %s0, %s394
      %p396 = pneg %p45
      %p397 = pneg %p42
      %p398 = pneg %p66
      %p399 = pneg %p63
      %p400 = pneg %p87
      %p401 = pneg %p84
      %p402 = pneg %p108
      %p403 = pneg %p105
      %p404 = pneg %p129
      %p405 = pneg %p126
      %p406 = pneg %p150
      %p407 = pneg %p147
      %p408 = pneg %p171
      %p409 = pneg %p168
      %p410 = pneg %p192
      %p411 = pneg %p189
      %p412 = pneg %p213
      %p413 = pneg %p210
      %p414 = pneg %p234
      %p415 = pneg %p231
      %p416 = pneg %p255
      %p417 = pneg %p252
      %p418 = pneg %p276
      %p419 = pneg %p273
      %p420 = pneg %p297
      %p421 = pneg %p294
      %p422 = pneg %p323
      %p423 = pneg %p320
      %p424 = scmp.lt.s32.totalorder %s24, 2
      %s425 = scalar_select %p424, %s24, 2
      %s426 = smul.addr %s425, 8
      %s427 = scalar_lea.vmem %s13, %s426
      %p428 = scmp.lt.s32.totalorder %s24, 2
      %s429 = scalar_select %p428, %s24, 2
      %s430 = smul.addr %s429, 8
      %s431 = scalar_lea.vmem %s0, %s430
      %p432 = scmp.lt.s32.totalorder %s24, 2
      %s433 = scalar_select %p432, %s24, 2
      %s434 = smul.addr %s433, 8
      %s435 = scalar_lea.vmem %s13, %s434
      %v436 = vld [vmem:[%s431] sm:$0x3f]
      %v437 = vld [vmem:[%s1] sm:$0xff]
      %v438 = vld [vmem:[%s2] sm:$0xff]
      %440 = vset.pattern.permute.xlu0 0
      %441 = vperm.xlu0 %440, %v438
      %v442 = vpop.permute.xlu0 %441
      %vm444 = vcmask 48128
      %v446 = vsel %vm444, %v437, 0
      %vm448 = vcmask 1045504
      %v450 = vsel %vm448, %v436, 0
      %452 = vmatprep.subr.mxu0 0.0
      %453 = vmatpush1.msra.mxu0 %v450
      %454 = vmatprep.subr.mxu0 0.0
      %455 = vmatpush1.msra.mxu0 0.0
      %456 = vmatprep.subr.mxu0 0.0
      %457 = vmatpush1.msra.mxu0 0.0
      %458 = vmatprep.subr.mxu0 0.0
      %459 = vmatpush1.msra.mxu0 0.0
      %460 = vmatprep.subr.mxu0 0.0
      %461 = vmatpush1.msra.mxu0 0.0
      %462 = vmatprep.subr.mxu0 0.0
      %463 = vmatpush1.msra.mxu0 0.0
      %464 = vmatprep.subr.mxu0 0.0
      %465 = vmatpush1.msra.mxu0 0.0
      %466 = vmatprep.subr.mxu0 0.0
      %467 = vmatpush1.msra.mxu0 0.0
      %468 = vmatprep.subr.mxu0 0.0
      %469 = vmatpush1.msra.mxu0 0.0
      %470 = vmatprep.subr.mxu0 0.0
      %471 = vmatpush1.msra.mxu0 0.0
      %472 = vmatprep.subr.mxu0 0.0
      %473 = vmatpush1.msra.mxu0 0.0
      %474 = vmatprep.subr.mxu0 0.0
      %475 = vmatpush1.msra.mxu0 0.0
      %476 = vmatprep.subr.mxu0 0.0
      %477 = vmatpush1.msra.mxu0 0.0
      %478 = vmatprep.subr.mxu0 0.0
      %479 = vmatpush1.msra.mxu0 0.0
      %480 = vmatprep.subr.mxu0 0.0
      %481 = vmatpush1.msra.mxu0 0.0
      %482 = vmatprep.subr.mxu0 0.0
      %483 = vmatpush1.msra.mxu0 0.0
      %484 = vmatprep.subr.mxu0 0.0
      %485 = vmatpush1.msra.mxu0 0.0
      %486 = vmatprep.subr.mxu0 0.0
      %487 = vmatpush1.msra.mxu0 0.0
      %488 = vmatprep.subr.mxu0 0.0
      %489 = vmatpush1.msra.mxu0 0.0
      %490 = vmatprep.subr.mxu0 0.0
      %491 = vmatpush1.msra.mxu0 0.0
      %492 = vmatprep.subr.mxu0 0.0
      %493 = vmatpush1.msra.mxu0 0.0
      %494 = vmatprep.subr.mxu0 0.0
      %495 = vmatpush1.msra.mxu0 0.0
      %496 = vmatprep.subr.mxu0 0.0
      %497 = vmatpush1.msra.mxu0 0.0
      %498 = vmatprep.subr.mxu0 0.0
      %499 = vmatpush1.msra.mxu0 0.0
      %500 = vmatprep.subr.mxu0 0.0
      %501 = vmatpush1.msra.mxu0 0.0
      %502 = vmatprep.subr.mxu0 0.0
      %503 = vmatpush1.msra.mxu0 0.0
      %504 = vmatprep.subr.mxu0 0.0
      %505 = vmatpush1.msra.mxu0 0.0
      %506 = vmatprep.subr.mxu0 0.0
      %507 = vmatpush1.msra.mxu0 0.0
      %508 = vmatprep.subr.mxu0 0.0
      %509 = vmatpush1.msra.mxu0 0.0
      %510 = vmatprep.subr.mxu0 0.0
      %511 = vmatpush1.msra.mxu0 0.0
      %512 = vmatprep.subr.mxu0 0.0
      %513 = vmatpush1.msra.mxu0 0.0
      %514 = vmatprep.subr.mxu0 0.0
      %515 = vmatpush1.msra.mxu0 0.0
      %516 = vmatprep.mubr.f32.mxu0 0.0
      %517 = vmatmul.mubr.f32.gmra.mrb[0].mxu0 %v446
      %v518 = vpop.f32.mrb[0].mxu0
      %v519 = vadd.f32 %v442, %v518
      %v520 = vpop.f32.mrb[0].mxu0
      %521 = vdwg.mxu0
      %v522 = vmax.f32 %v519, 0.0
      %v523 = vand.u32 2147483647, %v519
      %v524 = vsub.f32 0.0, %v523
      %v525 = vmul.f32 %v524, 1.442695
      %v526 = vpow.pop %v525
      %v527 = vadd.f32 %v526, 1.0
      %v528 = vlog2.pop %v527
      %v529 = vmul.f32 %v528, 0.6931472
      %v530 = vmul.f32 -0.5, %v526
      %v531 = vadd.f32 %v530, 1.0
      %v532 = vmul.f32 %v531, %v526
      %v533 = vand.u32 2147483647, %v526
      %vm534 = vcmp.lt.f32.partialorder %v533, 0.0004427343
      %v535 = vsel %vm534, %v532, %v529
      %v536 = vadd.f32 %v522, %v535
      %v537 = vld [vmem:[%s3] sm:$0xff]
      %v538 = vld [vmem:[%s4] sm:$0xff]
      %540 = vset.pattern.permute.xlu0 0
      %541 = vperm.xlu0 %540, %v538
      %v542 = vpop.permute.xlu0 %541
      %vm544 = vcmask 64512
      %v546 = vsel %vm544, %v537, 0
      %548 = vmatprep.subr.mxu0 0.0
      %549 = vmatpush1.msra.mxu0 %v536
      %550 = vmatprep.subr.mxu0 0.0
      %551 = vmatpush1.msra.mxu0 0.0
      %552 = vmatprep.subr.mxu0 0.0
      %553 = vmatpush1.msra.mxu0 0.0
      %554 = vmatprep.subr.mxu0 0.0
      %555 = vmatpush1.msra.mxu0 0.0
      %556 = vmatprep.subr.mxu0 0.0
      %557 = vmatpush1.msra.mxu0 0.0
      %558 = vmatprep.subr.mxu0 0.0
      %559 = vmatpush1.msra.mxu0 0.0
      %560 = vmatprep.subr.mxu0 0.0
      %561 = vmatpush1.msra.mxu0 0.0
      %562 = vmatprep.subr.mxu0 0.0
      %563 = vmatpush1.msra.mxu0 0.0
      %564 = vmatprep.subr.mxu0 0.0
      %565 = vmatpush1.msra.mxu0 0.0
      %566 = vmatprep.subr.mxu0 0.0
      %567 = vmatpush1.msra.mxu0 0.0
      %568 = vmatprep.subr.mxu0 0.0
      %569 = vmatpush1.msra.mxu0 0.0
      %570 = vmatprep.subr.mxu0 0.0
      %571 = vmatpush1.msra.mxu0 0.0
      %572 = vmatprep.subr.mxu0 0.0
      %573 = vmatpush1.msra.mxu0 0.0
      %574 = vmatprep.subr.mxu0 0.0
      %575 = vmatpush1.msra.mxu0 0.0
      %576 = vmatprep.subr.mxu0 0.0
      %577 = vmatpush1.msra.mxu0 0.0
      %578 = vmatprep.subr.mxu0 0.0
      %579 = vmatpush1.msra.mxu0 0.0
      %580 = vmatprep.subr.mxu0 0.0
      %581 = vmatpush1.msra.mxu0 0.0
      %582 = vmatprep.subr.mxu0 0.0
      %583 = vmatpush1.msra.mxu0 0.0
      %584 = vmatprep.subr.mxu0 0.0
      %585 = vmatpush1.msra.mxu0 0.0
      %586 = vmatprep.subr.mxu0 0.0
      %587 = vmatpush1.msra.mxu0 0.0
      %588 = vmatprep.subr.mxu0 0.0
      %589 = vmatpush1.msra.mxu0 0.0
      %590 = vmatprep.subr.mxu0 0.0
      %591 = vmatpush1.msra.mxu0 0.0
      %592 = vmatprep.subr.mxu0 0.0
      %593 = vmatpush1.msra.mxu0 0.0
      %594 = vmatprep.subr.mxu0 0.0
      %595 = vmatpush1.msra.mxu0 0.0
      %596 = vmatprep.subr.mxu0 0.0
      %597 = vmatpush1.msra.mxu0 0.0
      %598 = vmatprep.subr.mxu0 0.0
      %599 = vmatpush1.msra.mxu0 0.0
      %600 = vmatprep.subr.mxu0 0.0
      %601 = vmatpush1.msra.mxu0 0.0
      %602 = vmatprep.subr.mxu0 0.0
      %603 = vmatpush1.msra.mxu0 0.0
      %604 = vmatprep.subr.mxu0 0.0
      %605 = vmatpush1.msra.mxu0 0.0
      %606 = vmatprep.subr.mxu0 0.0
      %607 = vmatpush1.msra.mxu0 0.0
      %608 = vmatprep.subr.mxu0 0.0
      %609 = vmatpush1.msra.mxu0 0.0
      %610 = vmatprep.subr.mxu0 0.0
      %611 = vmatpush1.msra.mxu0 0.0
      %612 = vmatprep.mubr.f32.mxu0 0.0
      %613 = vmatmul.mubr.f32.gmra.mrb[0].mxu0 %v546
      %v614 = vpop.f32.mrb[0].mxu0
      %v615 = vadd.f32 %v542, %v614
      %v616 = vpop.f32.mrb[0].mxu0
      %617 = vdwg.mxu0
      %v618 = vmax.f32 %v615, 0.0
      %v619 = vand.u32 2147483647, %v615
      %v620 = vsub.f32 0.0, %v619
      %v621 = vmul.f32 %v620, 1.442695
      %v622 = vpow.pop %v621
      %v623 = vadd.f32 %v622, 1.0
      %v624 = vlog2.pop %v623
      %v625 = vmul.f32 %v624, 0.6931472
      %v626 = vmul.f32 -0.5, %v622
      %v627 = vadd.f32 %v626, 1.0
      %v628 = vmul.f32 %v627, %v622
      %v629 = vand.u32 2147483647, %v622
      %vm630 = vcmp.lt.f32.partialorder %v629, 0.0004427343
      %v631 = vsel %vm630, %v628, %v625
      %v632 = vadd.f32 %v618, %v631
      %v633 = vld [vmem:[%s5] sm:$0xff]
      %v634 = vld [vmem:[%s6] sm:$0xff]
      %636 = vset.pattern.permute.xlu0 0
      %637 = vperm.xlu0 %636, %v634
      %v638 = vpop.permute.xlu0 %637
      %v641 = vsel %vm544, %v633, 0
      %643 = vmatprep.subr.mxu0 0.0
      %644 = vmatpush1.msra.mxu0 %v632
      %645 = vmatprep.subr.mxu0 0.0
      %646 = vmatpush1.msra.mxu0 0.0
      %647 = vmatprep.subr.mxu0 0.0
      %648 = vmatpush1.msra.mxu0 0.0
      %649 = vmatprep.subr.mxu0 0.0
      %650 = vmatpush1.msra.mxu0 0.0
      %651 = vmatprep.subr.mxu0 0.0
      %652 = vmatpush1.msra.mxu0 0.0
      %653 = vmatprep.subr.mxu0 0.0
      %654 = vmatpush1.msra.mxu0 0.0
      %655 = vmatprep.subr.mxu0 0.0
      %656 = vmatpush1.msra.mxu0 0.0
      %657 = vmatprep.subr.mxu0 0.0
      %658 = vmatpush1.msra.mxu0 0.0
      %659 = vmatprep.subr.mxu0 0.0
      %660 = vmatpush1.msra.mxu0 0.0
      %661 = vmatprep.subr.mxu0 0.0
      %662 = vmatpush1.msra.mxu0 0.0
      %663 = vmatprep.subr.mxu0 0.0
      %664 = vmatpush1.msra.mxu0 0.0
      %665 = vmatprep.subr.mxu0 0.0
      %666 = vmatpush1.msra.mxu0 0.0
      %667 = vmatprep.subr.mxu0 0.0
      %668 = vmatpush1.msra.mxu0 0.0
      %669 = vmatprep.subr.mxu0 0.0
      %670 = vmatpush1.msra.mxu0 0.0
      %671 = vmatprep.subr.mxu0 0.0
      %672 = vmatpush1.msra.mxu0 0.0
      %673 = vmatprep.subr.mxu0 0.0
      %674 = vmatpush1.msra.mxu0 0.0
      %675 = vmatprep.subr.mxu0 0.0
      %676 = vmatpush1.msra.mxu0 0.0
      %677 = vmatprep.subr.mxu0 0.0
      %678 = vmatpush1.msra.mxu0 0.0
      %679 = vmatprep.subr.mxu0 0.0
      %680 = vmatpush1.msra.mxu0 0.0
      %681 = vmatprep.subr.mxu0 0.0
      %682 = vmatpush1.msra.mxu0 0.0
      %683 = vmatprep.subr.mxu0 0.0
      %684 = vmatpush1.msra.mxu0 0.0
      %685 = vmatprep.subr.mxu0 0.0
      %686 = vmatpush1.msra.mxu0 0.0
      %687 = vmatprep.subr.mxu0 0.0
      %688 = vmatpush1.msra.mxu0 0.0
      %689 = vmatprep.subr.mxu0 0.0
      %690 = vmatpush1.msra.mxu0 0.0
      %691 = vmatprep.subr.mxu0 0.0
      %692 = vmatpush1.msra.mxu0 0.0
      %693 = vmatprep.subr.mxu0 0.0
      %694 = vmatpush1.msra.mxu0 0.0
      %695 = vmatprep.subr.mxu0 0.0
      %696 = vmatpush1.msra.mxu0 0.0
      %697 = vmatprep.subr.mxu0 0.0
      %698 = vmatpush1.msra.mxu0 0.0
      %699 = vmatprep.subr.mxu0 0.0
      %700 = vmatpush1.msra.mxu0 0.0
      %701 = vmatprep.subr.mxu0 0.0
      %702 = vmatpush1.msra.mxu0 0.0
      %703 = vmatprep.subr.mxu0 0.0
      %704 = vmatpush1.msra.mxu0 0.0
      %705 = vmatprep.subr.mxu0 0.0
      %706 = vmatpush1.msra.mxu0 0.0
      %707 = vmatprep.mubr.f32.mxu0 0.0
      %708 = vmatmul.mubr.f32.gmra.mrb[0].mxu0 %v641
      %v709 = vpop.f32.mrb[0].mxu0
      %v710 = vadd.f32 %v638, %v709
      %v711 = vpop.f32.mrb[0].mxu0
      %712 = vdwg.mxu0
      %v713 = vmax.f32 %v710, 0.0
      %v714 = vand.u32 2147483647, %v710
      %v715 = vsub.f32 0.0, %v714
      %v716 = vmul.f32 %v715, 1.442695
      %v717 = vpow.pop %v716
      %v718 = vadd.f32 %v717, 1.0
      %v719 = vlog2.pop %v718
      %v720 = vmul.f32 %v719, 0.6931472
      %v721 = vmul.f32 -0.5, %v717
      %v722 = vadd.f32 %v721, 1.0
      %v723 = vmul.f32 %v722, %v717
      %v724 = vand.u32 2147483647, %v717
      %vm725 = vcmp.lt.f32.partialorder %v724, 0.0004427343
      %v726 = vsel %vm725, %v723, %v720
      %v727 = vadd.f32 %v713, %v726
      %v728 = vld [vmem:[%s7] sm:$0x3]
      %v729 = vld [vmem:[%s8] sm:$0x3]
      %731 = vset.pattern.permute.xlu0 0
      %732 = vperm.xlu0 %731, %v729
      %v733 = vpop.permute.xlu0 %732
      %v736 = vsel %vm544, %v728, 0
      %738 = vmatprep.subr.mxu0 0.0
      %739 = vmatpush1.msra.mxu0 %v727
      %740 = vmatprep.subr.mxu0 0.0
      %741 = vmatpush1.msra.mxu0 0.0
      %742 = vmatprep.subr.mxu0 0.0
      %743 = vmatpush1.msra.mxu0 0.0
      %744 = vmatprep.subr.mxu0 0.0
      %745 = vmatpush1.msra.mxu0 0.0
      %746 = vmatprep.subr.mxu0 0.0
      %747 = vmatpush1.msra.mxu0 0.0
      %748 = vmatprep.subr.mxu0 0.0
      %749 = vmatpush1.msra.mxu0 0.0
      %750 = vmatprep.subr.mxu0 0.0
      %751 = vmatpush1.msra.mxu0 0.0
      %752 = vmatprep.subr.mxu0 0.0
      %753 = vmatpush1.msra.mxu0 0.0
      %754 = vmatprep.subr.mxu0 0.0
      %755 = vmatpush1.msra.mxu0 0.0
      %756 = vmatprep.subr.mxu0 0.0
      %757 = vmatpush1.msra.mxu0 0.0
      %758 = vmatprep.subr.mxu0 0.0
      %759 = vmatpush1.msra.mxu0 0.0
      %760 = vmatprep.subr.mxu0 0.0
      %761 = vmatpush1.msra.mxu0 0.0
      %762 = vmatprep.subr.mxu0 0.0
      %763 = vmatpush1.msra.mxu0 0.0
      %764 = vmatprep.subr.mxu0 0.0
      %765 = vmatpush1.msra.mxu0 0.0
      %766 = vmatprep.subr.mxu0 0.0
      %767 = vmatpush1.msra.mxu0 0.0
      %768 = vmatprep.subr.mxu0 0.0
      %769 = vmatpush1.msra.mxu0 0.0
      %770 = vmatprep.subr.mxu0 0.0
      %771 = vmatpush1.msra.mxu0 0.0
      %772 = vmatprep.subr.mxu0 0.0
      %773 = vmatpush1.msra.mxu0 0.0
      %774 = vmatprep.subr.mxu0 0.0
      %775 = vmatpush1.msra.mxu0 0.0
      %776 = vmatprep.subr.mxu0 0.0
      %777 = vmatpush1.msra.mxu0 0.0
      %778 = vmatprep.subr.mxu0 0.0
      %779 = vmatpush1.msra.mxu0 0.0
      %780 = vmatprep.subr.mxu0 0.0
      %781 = vmatpush1.msra.mxu0 0.0
      %782 = vmatprep.subr.mxu0 0.0
      %783 = vmatpush1.msra.mxu0 0.0
      %784 = vmatprep.subr.mxu0 0.0
      %785 = vmatpush1.msra.mxu0 0.0
      %786 = vmatprep.subr.mxu0 0.0
      %787 = vmatpush1.msra.mxu0 0.0
      %788 = vmatprep.subr.mxu0 0.0
      %789 = vmatpush1.msra.mxu0 0.0
      %790 = vmatprep.subr.mxu0 0.0
      %791 = vmatpush1.msra.mxu0 0.0
      %792 = vmatprep.subr.mxu0 0.0
      %793 = vmatpush1.msra.mxu0 0.0
      %794 = vmatprep.subr.mxu0 0.0
      %795 = vmatpush1.msra.mxu0 0.0
      %796 = vmatprep.subr.mxu0 0.0
      %797 = vmatpush1.msra.mxu0 0.0
      %798 = vmatprep.subr.mxu0 0.0
      %799 = vmatpush1.msra.mxu0 0.0
      %800 = vmatprep.subr.mxu0 0.0
      %801 = vmatpush1.msra.mxu0 0.0
      %802 = vmatprep.mubr.f32.mxu0 0.0
      %803 = vmatmul.mubr.f32.gmra.mrb[0].mxu0 %v736
      %v804 = vpop.f32.mrb[0].mxu0
      %v805 = vadd.f32 %v733, %v804
      %v806 = vpop.f32.mrb[0].mxu0
      %807 = vdwg.mxu0
      %v808 = vmax.f32 %v805, 0.0
      %v809 = vand.u32 2147483647, %v805
      %v810 = vsub.f32 0.0, %v809
      %v811 = vmul.f32 %v810, 1.442695
      %v812 = vpow.pop %v811
      %v813 = vadd.f32 %v812, 1.0
      %v814 = vlog2.pop %v813
      %v815 = vmul.f32 %v814, 0.6931472
      %v816 = vmul.f32 -0.5, %v812
      %v817 = vadd.f32 %v816, 1.0
      %v818 = vmul.f32 %v817, %v812
      %v819 = vand.u32 2147483647, %v812
      %vm820 = vcmp.lt.f32.partialorder %v819, 0.0004427343
      %v821 = vsel %vm820, %v818, %v815
      %v822 = vadd.f32 %v808, %v821
      %v823 = vld [vmem:[%s9] sm:$0x1f]
      %v824 = vld [vmem:[%s10] sm:$0x1f]
      %826 = vset.pattern.permute.xlu0 0
      %827 = vperm.xlu0 %826, %v824
      %v828 = vpop.permute.xlu0 %827
      %vm830 = vcmask 15360
      %v832 = vsel %vm830, %v823, 0
      %vm834 = vcmask 1041408
      %v836 = vsel %vm834, %v822, 0
      %838 = vmatprep.subr.mxu0 0.0
      %839 = vmatpush1.msra.mxu0 %v836
      %840 = vmatprep.subr.mxu0 0.0
      %841 = vmatpush1.msra.mxu0 0.0
      %842 = vmatprep.subr.mxu0 0.0
      %843 = vmatpush1.msra.mxu0 0.0
      %844 = vmatprep.subr.mxu0 0.0
      %845 = vmatpush1.msra.mxu0 0.0
      %846 = vmatprep.subr.mxu0 0.0
      %847 = vmatpush1.msra.mxu0 0.0
      %848 = vmatprep.subr.mxu0 0.0
      %849 = vmatpush1.msra.mxu0 0.0
      %850 = vmatprep.subr.mxu0 0.0
      %851 = vmatpush1.msra.mxu0 0.0
      %852 = vmatprep.subr.mxu0 0.0
      %853 = vmatpush1.msra.mxu0 0.0
      %854 = vmatprep.subr.mxu0 0.0
      %855 = vmatpush1.msra.mxu0 0.0
      %856 = vmatprep.subr.mxu0 0.0
      %857 = vmatpush1.msra.mxu0 0.0
      %858 = vmatprep.subr.mxu0 0.0
      %859 = vmatpush1.msra.mxu0 0.0
      %860 = vmatprep.subr.mxu0 0.0
      %861 = vmatpush1.msra.mxu0 0.0
      %862 = vmatprep.subr.mxu0 0.0
      %863 = vmatpush1.msra.mxu0 0.0
      %864 = vmatprep.subr.mxu0 0.0
      %865 = vmatpush1.msra.mxu0 0.0
      %866 = vmatprep.subr.mxu0 0.0
      %867 = vmatpush1.msra.mxu0 0.0
      %868 = vmatprep.subr.mxu0 0.0
      %869 = vmatpush1.msra.mxu0 0.0
      %870 = vmatprep.subr.mxu0 0.0
      %871 = vmatpush1.msra.mxu0 0.0
      %872 = vmatprep.subr.mxu0 0.0
      %873 = vmatpush1.msra.mxu0 0.0
      %874 = vmatprep.subr.mxu0 0.0
      %875 = vmatpush1.msra.mxu0 0.0
      %876 = vmatprep.subr.mxu0 0.0
      %877 = vmatpush1.msra.mxu0 0.0
      %878 = vmatprep.subr.mxu0 0.0
      %879 = vmatpush1.msra.mxu0 0.0
      %880 = vmatprep.subr.mxu0 0.0
      %881 = vmatpush1.msra.mxu0 0.0
      %882 = vmatprep.subr.mxu0 0.0
      %883 = vmatpush1.msra.mxu0 0.0
      %884 = vmatprep.subr.mxu0 0.0
      %885 = vmatpush1.msra.mxu0 0.0
      %886 = vmatprep.subr.mxu0 0.0
      %887 = vmatpush1.msra.mxu0 0.0
      %888 = vmatprep.subr.mxu0 0.0
      %889 = vmatpush1.msra.mxu0 0.0
      %890 = vmatprep.subr.mxu0 0.0
      %891 = vmatpush1.msra.mxu0 0.0
      %892 = vmatprep.subr.mxu0 0.0
      %893 = vmatpush1.msra.mxu0 0.0
      %894 = vmatprep.subr.mxu0 0.0
      %895 = vmatpush1.msra.mxu0 0.0
      %896 = vmatprep.subr.mxu0 0.0
      %897 = vmatpush1.msra.mxu0 0.0
      %898 = vmatprep.subr.mxu0 0.0
      %899 = vmatpush1.msra.mxu0 0.0
      %900 = vmatprep.subr.mxu0 0.0
      %901 = vmatpush1.msra.mxu0 0.0
      %902 = vmatprep.mubr.f32.mxu0 0.0
      %903 = vmatmul.mubr.f32.gmra.mrb[0].mxu0 %v832
      %v904 = vpop.f32.mrb[0].mxu0
      %v905 = vadd.f32 %v828, %v904
      %v906 = vpop.f32.mrb[0].mxu0
      %907 = vdwg.mxu0
      %v908 = vmax.f32 %v905, 0.0
      %v909 = vand.u32 2147483647, %v905
      %v910 = vsub.f32 0.0, %v909
      %v911 = vmul.f32 %v910, 1.442695
      %v912 = vpow.pop %v911
      %v913 = vadd.f32 %v912, 1.0
      %v914 = vlog2.pop %v913
      %v915 = vmul.f32 %v914, 0.6931472
      %v916 = vmul.f32 -0.5, %v912
      %v917 = vadd.f32 %v916, 1.0
      %v918 = vmul.f32 %v917, %v912
      %v919 = vand.u32 2147483647, %v912
      %vm920 = vcmp.lt.f32.partialorder %v919, 0.0004427343
      %v921 = vsel %vm920, %v918, %v915
      %v922 = vadd.f32 %v908, %v921
      %v923 = vld [vmem:[%s11] sm:$0x1f]
      %v924 = vld [vmem:[%s12] sm:$0x1f]
      %926 = vset.pattern.permute.xlu0 0
      %927 = vperm.xlu0 %926, %v924
      %v928 = vpop.permute.xlu0 %927
      %vm930 = vcmask 39936
      %v932 = vsel %vm930, %v923, 0
      %vm934 = vcmask 1044480
      %v936 = vsel %vm934, %v922, 0
      %938 = vmatprep.subr.mxu0 0.0
      %939 = vmatpush1.msra.mxu0 %v936
      %940 = vmatprep.subr.mxu0 0.0
      %941 = vmatpush1.msra.mxu0 0.0
      %942 = vmatprep.subr.mxu0 0.0
      %943 = vmatpush1.msra.mxu0 0.0
      %944 = vmatprep.subr.mxu0 0.0
      %945 = vmatpush1.msra.mxu0 0.0
      %946 = vmatprep.subr.mxu0 0.0
      %947 = vmatpush1.msra.mxu0 0.0
      %948 = vmatprep.subr.mxu0 0.0
      %949 = vmatpush1.msra.mxu0 0.0
      %950 = vmatprep.subr.mxu0 0.0
      %951 = vmatpush1.msra.mxu0 0.0
      %952 = vmatprep.subr.mxu0 0.0
      %953 = vmatpush1.msra.mxu0 0.0
      %954 = vmatprep.subr.mxu0 0.0
      %955 = vmatpush1.msra.mxu0 0.0
      %956 = vmatprep.subr.mxu0 0.0
      %957 = vmatpush1.msra.mxu0 0.0
      %958 = vmatprep.subr.mxu0 0.0
      %959 = vmatpush1.msra.mxu0 0.0
      %960 = vmatprep.subr.mxu0 0.0
      %961 = vmatpush1.msra.mxu0 0.0
      %962 = vmatprep.subr.mxu0 0.0
      %963 = vmatpush1.msra.mxu0 0.0
      %964 = vmatprep.subr.mxu0 0.0
      %965 = vmatpush1.msra.mxu0 0.0
      %966 = vmatprep.subr.mxu0 0.0
      %967 = vmatpush1.msra.mxu0 0.0
      %968 = vmatprep.subr.mxu0 0.0
      %969 = vmatpush1.msra.mxu0 0.0
      %970 = vmatprep.subr.mxu0 0.0
      %971 = vmatpush1.msra.mxu0 0.0
      %972 = vmatprep.subr.mxu0 0.0
      %973 = vmatpush1.msra.mxu0 0.0
      %974 = vmatprep.subr.mxu0 0.0
      %975 = vmatpush1.msra.mxu0 0.0
      %976 = vmatprep.subr.mxu0 0.0
      %977 = vmatpush1.msra.mxu0 0.0
      %978 = vmatprep.subr.mxu0 0.0
      %979 = vmatpush1.msra.mxu0 0.0
      %980 = vmatprep.subr.mxu0 0.0
      %981 = vmatpush1.msra.mxu0 0.0
      %982 = vmatprep.subr.mxu0 0.0
      %983 = vmatpush1.msra.mxu0 0.0
      %984 = vmatprep.subr.mxu0 0.0
      %985 = vmatpush1.msra.mxu0 0.0
      %986 = vmatprep.subr.mxu0 0.0
      %987 = vmatpush1.msra.mxu0 0.0
      %988 = vmatprep.subr.mxu0 0.0
      %989 = vmatpush1.msra.mxu0 0.0
      %990 = vmatprep.subr.mxu0 0.0
      %991 = vmatpush1.msra.mxu0 0.0
      %992 = vmatprep.subr.mxu0 0.0
      %993 = vmatpush1.msra.mxu0 0.0
      %994 = vmatprep.subr.mxu0 0.0
      %995 = vmatpush1.msra.mxu0 0.0
      %996 = vmatprep.subr.mxu0 0.0
      %997 = vmatpush1.msra.mxu0 0.0
      %998 = vmatprep.subr.mxu0 0.0
      %999 = vmatpush1.msra.mxu0 0.0
      %1000 = vmatprep.subr.mxu0 0.0
      %1001 = vmatpush1.msra.mxu0 0.0
      %1002 = vmatprep.mubr.f32.mxu0 0.0
      %1003 = vmatmul.mubr.f32.gmra.mrb[0].mxu0 %v932
      %v1004 = vpop.f32.mrb[0].mxu0
      %v1005 = vadd.f32 %v928, %v1004
      %v1006 = vpop.f32.mrb[0].mxu0
      %1007 = vdwg.mxu0
      %1008 = vst [vmem:[%s435] sm:$0x1f] %v1005
      %p1009 = scmp.lt.s32.totalorder %s24, 2
      %s1010 = scalar_select %p1009, %s24, 2
      %s1011 = smul.addr %s1010, 8
      %s1012 = scalar_lea.vmem %s13, %s1011
      // Predicated region
      $region73: #{cytokine_forward.1} parent=71 // pred_check
        %p1013 = pneg %p320
      $region74: #{cytokine_forward.1} parent=71 // pred_check_branch
        %1015 = sbr.rel (%p1013) target = $region76
      $region75: #{cytokine_forward.1} parent=71 // pred_region
        _
      $region76: #{cytokine_forward.1} parent=71 // pred_fallthru
        _
    $region72: #{cytokine_forward.1} parent=5 // pred_fallthru
      _
    %p1016 = scmp.le.s32.totalorder 2, %s19
    // Predicated region
    $region77: #{cytokine_forward.1} parent=5 // pred_check
      %p1017 = pneg %p1016
    $region78: #{cytokine_forward.1} parent=5 // pred_check_branch
      %1019 = sbr.rel (%p1017) target = $region80
    $region79: #{cytokine_forward.1} parent=5 // pred_region
      %s1020 = ssub.s32 %s19, 2
      // Predicated region
      $region81: #{cytokine_forward.1} parent=79 // pred_check
        %p1021 = pneg %p326
      $region82: #{cytokine_forward.1} parent=79 // pred_check_branch
        %1023 = sbr.rel (%p1021) target = $region84
      $region83: #{cytokine_forward.1} parent=79 // pred_region
        %p1024 = scmp.lt.s32.totalorder %s25, 2
        %s1025 = scalar_select %p1024, %s25, 2
        %s1026 = smul.addr %s1025, 8
        %s1027 = scalar_lea.vmem %s13, %s1026
      $region84: #{cytokine_forward.1} parent=79 // pred_fallthru
        _
    $region80: #{cytokine_forward.1} parent=5 // pred_fallthru
      _
  $region6: #{cytokine_forward.1} parent=0 // loop_footer
    %s23 = sadd.s32 1, %s19
  $region7: #{cytokine_forward.1} parent=0 // loop_footer_branch
    %18 = sbr.rel target = $region3
  $region8: #{cytokine_forward.1} parent=0 // loop_exit
    _

</llo_original>
